<compile_context>
chip_gen: v6e
topology: v6e:2x2x1
jax: 0.10.0
libtpu: 0.0.40
codegen_flags: <defaults>
</compile_context>

<pallas_src>
import jax
import jax.numpy as jnp
from jax.experimental import pallas as pl
from jax.experimental.pallas import tpu as pltpu


def _round_up(n, m):
    return ((n + m - 1) // m) * m


def _cdiv(a, b):
    return -(-a // b)


def _vmem_capacity_bytes():
    try:
        return int(pltpu.get_tpu_info().vmem_capacity_bytes)
    except Exception:
        return 64 * 2**20  # conservative: v7x per-TC VMEM


def _pad2d(a, rows, cols, dtype):
    a = jnp.asarray(a).astype(dtype)
    r, c = a.shape
    if (r, c) == (rows, cols):
        return a
    return jnp.pad(a, ((0, rows - r), (0, cols - c)))


# --------------------------------------------------------------------------
# One-time parameter packing (do NOT call per forward step).
# --------------------------------------------------------------------------
def pack_encoder_params(w1, b1, w2, b2, *, compute_dtype=jnp.bfloat16,
                        hidden_chunk_target=512):
    """Pad/cast Encoder weights once.  Zero padding of H / D_out is exact:
    padded hidden columns give relu(0 + 0) = 0 and only hit zero rows of w2."""
    w1 = jnp.asarray(w1)
    w2 = jnp.asarray(w2)
    D_in, H = w1.shape
    H2, D_out = w2.shape
    assert H2 == H, "w1/w2 shapes inconsistent"

    Op = _round_up(D_out, 128)
    Hp = _round_up(H, 128)

    cbytes = jnp.dtype(compute_dtype).itemsize
    budget = _vmem_capacity_bytes() // 4          # ~32 MiB v5e/v6e, ~16 MiB v7x
    weight_bytes = (D_in * Hp + Hp * Op) * cbytes + 8 * (Hp + Op) * 4
    if weight_bytes <= budget:
        th = Hp                                   # weights fully VMEM-resident
    else:
        th = max(256, (hidden_chunk_target // 256) * 256)   # 256-aligned chunk
        Hp = _round_up(H, th)

    return dict(
        w1=_pad2d(w1, D_in, Hp, compute_dtype),
        b1=_pad2d(jnp.asarray(b1).reshape(1, H), 1, Hp, jnp.float32),
        w2=_pad2d(w2, Hp, Op, compute_dtype),
        b2=_pad2d(jnp.asarray(b2).reshape(1, D_out), 1, Op, jnp.float32),
        D_in=D_in, H=H, D_out=D_out, Hp=Hp, Op=Op, th=th,
        compute_dtype=jnp.dtype(compute_dtype),
    )


# --------------------------------------------------------------------------
# Kernels
# --------------------------------------------------------------------------
def _encoder_kernel_resident(x_ref, w1_ref, b1_ref, w2_ref, b2_ref, o_ref):
    """Weights fully VMEM-resident: no accumulator, direct lane-dense store."""
    cdt = w1_ref.dtype
    h = jnp.dot(x_ref[...].astype(cdt), w1_ref[...],
                preferred_element_type=jnp.float32)
    h = jnp.maximum(h + b1_ref[...], 0.0)
    y = jnp.dot(h.astype(cdt), w2_ref[...], preferred_element_type=jnp.float32)
    o_ref[...] = jnp.maximum(y + b2_ref[...], 0.0).astype(o_ref.dtype)


def _encoder_kernel_chunked(x_ref, w1_ref, b1_ref, w2_ref, b2_ref, o_ref,
                            acc_ref):
    """H processed in chunks along the trailing ("arbitrary") grid axis."""
    j = pl.program_id(1)

    @pl.when(j == 0)
    def _init():
        acc_ref[...] = jnp.zeros_like(acc_ref)

    cdt = w1_ref.dtype
    h = jnp.dot(x_ref[...].astype(cdt), w1_ref[...],
                preferred_element_type=jnp.float32)
    h = jnp.maximum(h + b1_ref[...], 0.0)
    acc_ref[...] += jnp.dot(h.astype(cdt), w2_ref[...],
                            preferred_element_type=jnp.float32)

    @pl.when(j == pl.num_programs(1) - 1)
    def _finalize():
        o_ref[...] = jnp.maximum(acc_ref[...] + b2_ref[...],
                                 0.0).astype(o_ref.dtype)


# --------------------------------------------------------------------------
# pallas_call construction
# --------------------------------------------------------------------------
def _const_spec(shape, index_map, single_buffer):
    # Constant-block operands: single-buffer to halve their VMEM footprint.
    if single_buffer:
        return pl.BlockSpec(shape, index_map, pipeline_mode=pl.Buffered(1))
    return pl.BlockSpec(shape, index_map)


def _build_call(*, Bp, D_in, Hp, Op, tb, th, x_dtype, out_dtype,
                compute_dtype, single_buffer_consts):
    n_b = Bp // tb
    n_h = Hp // th
    cbytes = jnp.dtype(compute_dtype).itemsize
    xbytes = jnp.dtype(x_dtype).itemsize
    obytes = jnp.dtype(out_dtype).itemsize
    wbuf = 1 if single_buffer_consts else 2

    cost = pl.CostEstimate(
        flops=2 * Bp * (D_in * Hp + Hp * Op),
        transcendentals=0,
        bytes_accessed=(Bp * D_in * xbytes + Bp * Op * obytes
                        + (D_in * Hp + Hp * Op) * cbytes + (Hp + Op) * 4),
    )

    if n_h == 1:
        # Weight-resident path: weights/biases have constant block indices.
        est = (2 * tb * D_in * xbytes + 2 * tb * Op * obytes
               + wbuf * (D_in * Hp + Hp * Op) * cbytes
               + wbuf * 8 * (Hp + Op) * 4
               + tb * Hp * 4 + tb * Op * 4)            # live f32 intermediates
        grid = (n_b,)
        in_specs = [
            pl.BlockSpec((tb, D_in), lambda i: (i, 0)),                   # x
            _const_spec((D_in, Hp), lambda i: (0, 0), single_buffer_consts),
            _const_spec((1, Hp), lambda i: (0, 0), single_buffer_consts),
            _const_spec((Hp, Op), lambda i: (0, 0), single_buffer_consts),
            _const_spec((1, Op), lambda i: (0, 0), single_buffer_consts),
        ]
        out_spec = pl.BlockSpec((tb, Op), lambda i: (i, 0))
        scratch = []
        kernel = _encoder_kernel_resident
        semantics = ("parallel",)
    else:
        est = (2 * tb * D_in * xbytes + 2 * tb * Op * obytes
               + 2 * (D_in * th + th * Op) * cbytes + 2 * 8 * th * 4
               + wbuf * 8 * Op * 4
               + tb * Op * 4 + tb * th * 4)
        grid = (n_b, n_h)
        in_specs = [
            pl.BlockSpec((tb, D_in), lambda i, j: (i, 0)),                # x
            pl.BlockSpec((D_in, th), lambda i, j: (0, j)),                # w1
            pl.BlockSpec((1, th), lambda i, j: (0, j)),                   # b1
            pl.BlockSpec((th, Op), lambda i, j: (j, 0)),                  # w2
            _const_spec((1, Op), lambda i, j: (0, 0), single_buffer_consts),
        ]
        out_spec = pl.BlockSpec((tb, Op), lambda i, j: (i, 0))
        scratch = [pltpu.VMEM((tb, Op), jnp.float32)]
        kernel = _encoder_kernel_chunked
        semantics = ("parallel", "arbitrary")

    vmem_cap = _vmem_capacity_bytes()
    vmem_limit = int(min(vmem_cap - 8 * 2**20,
                         max(32 * 2**20, 2 * est + 4 * 2**20)))

    return pl.pallas_call(
        kernel,
        out_shape=jax.ShapeDtypeStruct((Bp, Op), out_dtype),
        grid_spec=pltpu.PrefetchScalarGridSpec(
            num_scalar_prefetch=0,
            grid=grid,
            in_specs=in_specs,
            out_specs=out_spec,
            scratch_shapes=scratch,
        ),
        compiler_params=pltpu.CompilerParams(
            dimension_semantics=semantics,
            vmem_limit_bytes=vmem_limit,
        ),
        cost_estimate=cost,
    )


# --------------------------------------------------------------------------
# Forward wrapper
# --------------------------------------------------------------------------
def encoder_forward(x, packed, *, batch_tile=256, out_dtype=None):
    """relu(relu(x @ w1 + b1) @ w2 + b2) using params from pack_encoder_params."""
    B, D_in = x.shape
    assert D_in == packed["D_in"], "x feature dim mismatch"
    Hp, Op, th = packed["Hp"], packed["Op"], packed["th"]
    D_out = packed["D_out"]
    out_dtype = x.dtype if out_dtype is None else out_dtype

    chunked = (Hp // th) > 1
    if chunked:
        # Weights are re-streamed per batch tile; raise arithmetic intensity.
        batch_tile = max(batch_tile, 512)

    n_b = max(1, _cdiv(B, batch_tile))
    if B > 8 and n_b == 1:
        n_b = 2                    # span both TCs on v7x; harmless on v5e/v6e
    tb = _round_up(_cdiv(B, n_b), 8)
    Bp = n_b * tb

    xp = x
    if Bp != B:
        xp = jnp.pad(x, ((0, Bp - B), (0, 0)))   # pad ragged last tile only

    args = (xp, packed["w1"], packed["b1"], packed["w2"], packed["b2"])
    kwargs = dict(Bp=Bp, D_in=D_in, Hp=Hp, Op=Op, tb=tb, th=th,
                  x_dtype=x.dtype, out_dtype=out_dtype,
                  compute_dtype=packed["compute_dtype"])

    try:
        out_p = _build_call(single_buffer_consts=True, **kwargs)(*args)
    except Exception as e:
        # Only fall back if this Pallas build rejects single-buffering
        # (pipeline_mode=pl.Buffered(1)); re-raise anything else.
        msg = str(e).lower()
        if ("buffer" not in msg) and ("pipeline" not in msg):
            raise
        out_p = _build_call(single_buffer_consts=False, **kwargs)(*args)

    return out_p[:B, :D_out]


def encoder_reference(x, w1, b1, w2, b2, *, compute_dtype=jnp.bfloat16):
    """Pure-JAX reference using the same bf16-in / f32-accumulate recipe."""
    xc = x.astype(compute_dtype)
    w1c = jnp.asarray(w1).astype(compute_dtype)
    w2c = jnp.asarray(w2).astype(compute_dtype)
    b1f = jnp.asarray(b1).reshape(1, -1).astype(jnp.float32)
    b2f = jnp.asarray(b2).reshape(1, -1).astype(jnp.float32)
    h = jnp.maximum(
        jnp.dot(xc, w1c, preferred_element_type=jnp.float32) + b1f, 0.0)
    y = jnp.dot(h.astype(compute_dtype), w2c,
                preferred_element_type=jnp.float32) + b2f
    return jnp.maximum(y, 0.0).astype(x.dtype)


if __name__ == "__main__":
    # Small shapes consistent with Encoder(D_in, H, D_out).
    B, D_in, H, D_out = 8, 32, 64, 16

    key = jax.random.PRNGKey(0)
    kx, kw1, kb1, kw2, kb2 = jax.random.split(key, 5)

    x = jax.random.normal(kx, (B, D_in), dtype=jnp.float32)
    # Deterministic synthetic parameters stored as [in, out] (transposed from
    # nn.Linear's [out, in]); exact init values don't affect forward semantics.
    w1 = jax.random.normal(kw1, (D_in, H), dtype=jnp.float32) * 0.1
    b1 = jax.random.normal(kb1, (1, H), dtype=jnp.float32) * 0.1
    w2 = jax.random.normal(kw2, (H, D_out), dtype=jnp.float32) * 0.1
    b2 = jax.random.normal(kb2, (1, D_out), dtype=jnp.float32) * 0.1

    packed = pack_encoder_params(w1, b1, w2, b2)     # once, at init
    out = jax.block_until_ready(encoder_forward(x, packed))

    ref = encoder_reference(x, w1, b1, w2, b2)
    assert out.shape == (B, D_out)
    assert jnp.allclose(out, ref, atol=1e-2, rtol=1e-2), float(
        jnp.max(jnp.abs(out - ref)))

    print("KERNEL_OK")
</pallas_src>

<mosaic_0001>
module attributes {stable_mosaic.version = 11 : i64} {
  func.func @_encoder_kernel_resident(%arg0: i32, %arg1: memref<8x32xf32, #tpu.memory_space<vmem>>, %arg2: memref<32x128xbf16, #tpu.memory_space<vmem>>, %arg3: memref<1x128xf32, #tpu.memory_space<vmem>>, %arg4: memref<128x128xbf16, #tpu.memory_space<vmem>>, %arg5: memref<1x128xf32, #tpu.memory_space<vmem>>, %arg6: memref<8x128xf32, #tpu.memory_space<vmem>>) attributes {dimension_semantics = [#tpu.dimension_semantics<parallel>], iteration_bounds = array<i64: 1>, scalar_prefetch = 0 : i64, scratch_operands = 0 : i64, tpu.core_type = #tpu.core_type<tc>, window_params = [{transform_indices = @transform_0, window_bounds = array<i64: 8, 32>}, {pipeline_mode = #tpu.pipeline_mode<synchronous>, transform_indices = @transform_1, window_bounds = array<i64: 32, 128>}, {pipeline_mode = #tpu.pipeline_mode<synchronous>, transform_indices = @transform_2, window_bounds = array<i64: 1, 128>}, {pipeline_mode = #tpu.pipeline_mode<synchronous>, transform_indices = @transform_3, window_bounds = array<i64: 128, 128>}, {pipeline_mode = #tpu.pipeline_mode<synchronous>, transform_indices = @transform_4, window_bounds = array<i64: 1, 128>}, {transform_indices = @transform_5, window_bounds = array<i64: 8, 128>}]} {
    %c0 = arith.constant 0 : index
    %c0_0 = arith.constant 0 : index
    %0 = vector.load %arg1[%c0, %c0_0] : memref<8x32xf32, #tpu.memory_space<vmem>>, vector<8x32xf32>
    %1 = arith.truncf %0 : vector<8x32xf32> to vector<8x32xbf16>
    %c0_1 = arith.constant 0 : index
    %c0_2 = arith.constant 0 : index
    %2 = vector.load %arg2[%c0_1, %c0_2] : memref<32x128xbf16, #tpu.memory_space<vmem>>, vector<32x128xbf16>
    %cst = arith.constant dense<0.000000e+00> : vector<8x128xf32>
    %3 = tpu.matmul %1, %2, %cst {dimension_numbers = #tpu.dot_dimension_numbers<[1], [0], [0], [1], [0, 0, 1, 1], [], []>} : vector<8x32xbf16>, vector<32x128xbf16>, vector<8x128xf32> -> vector<8x128xf32>
    %c0_3 = arith.constant 0 : index
    %c0_4 = arith.constant 0 : index
    %4 = vector.load %arg3[%c0_3, %c0_4] : memref<1x128xf32, #tpu.memory_space<vmem>>, vector<1x128xf32>
    %5 = vector.broadcast %4 : vector<1x128xf32> to vector<8x128xf32>
    %6 = arith.addf %3, %5 : vector<8x128xf32>
    %cst_5 = arith.constant 0.000000e+00 : f32
    %7 = vector.broadcast %cst_5 : f32 to vector<8x128xf32>
    %8 = arith.maximumf %6, %7 : vector<8x128xf32>
    %9 = arith.truncf %8 : vector<8x128xf32> to vector<8x128xbf16>
    %c0_6 = arith.constant 0 : index
    %c0_7 = arith.constant 0 : index
    %10 = vector.load %arg4[%c0_6, %c0_7] : memref<128x128xbf16, #tpu.memory_space<vmem>>, vector<128x128xbf16>
    %cst_8 = arith.constant dense<0.000000e+00> : vector<8x128xf32>
    %11 = tpu.matmul %9, %10, %cst_8 {dimension_numbers = #tpu.dot_dimension_numbers<[1], [0], [0], [1], [0, 0, 1, 1], [], []>} : vector<8x128xbf16>, vector<128x128xbf16>, vector<8x128xf32> -> vector<8x128xf32>
    %c0_9 = arith.constant 0 : index
    %c0_10 = arith.constant 0 : index
    %12 = vector.load %arg5[%c0_9, %c0_10] : memref<1x128xf32, #tpu.memory_space<vmem>>, vector<1x128xf32>
    %13 = vector.broadcast %12 : vector<1x128xf32> to vector<8x128xf32>
    %14 = arith.addf %11, %13 : vector<8x128xf32>
    %cst_11 = arith.constant 0.000000e+00 : f32
    %15 = vector.broadcast %cst_11 : f32 to vector<8x128xf32>
    %16 = arith.maximumf %14, %15 : vector<8x128xf32>
    %c0_12 = arith.constant 0 : index
    %c0_13 = arith.constant 0 : index
    %17 = vector.load %arg6[%c0_12, %c0_13] : memref<8x128xf32, #tpu.memory_space<vmem>>, vector<8x128xf32>
    tpu.vector_store %arg6[%c0_12, %c0_13], %16 {strides = array<i32>} : memref<8x128xf32, #tpu.memory_space<vmem>>, vector<8x128xf32>,
    return
  }
  func.func @transform_0(%arg0: i32) -> (i32, i32) {
    %c0_i32 = arith.constant 0 : i32
    %c0_i32_0 = arith.constant 0 : i32
    return %arg0, %c0_i32 : i32, i32
  }
  func.func @transform_1(%arg0: i32) -> (i32, i32) {
    %c0_i32 = arith.constant 0 : i32
    %c0_i32_0 = arith.constant 0 : i32
    %c0_i32_1 = arith.constant 0 : i32
    return %c0_i32, %c0_i32_0 : i32, i32
  }
  func.func @transform_2(%arg0: i32) -> (i32, i32) {
    %c0_i32 = arith.constant 0 : i32
    %c0_i32_0 = arith.constant 0 : i32
    %c0_i32_1 = arith.constant 0 : i32
    return %c0_i32, %c0_i32_0 : i32, i32
  }
  func.func @transform_3(%arg0: i32) -> (i32, i32) {
    %c0_i32 = arith.constant 0 : i32
    %c0_i32_0 = arith.constant 0 : i32
    %c0_i32_1 = arith.constant 0 : i32
    return %c0_i32, %c0_i32_0 : i32, i32
  }
  func.func @transform_4(%arg0: i32) -> (i32, i32) {
    %c0_i32 = arith.constant 0 : i32
    %c0_i32_0 = arith.constant 0 : i32
    %c0_i32_1 = arith.constant 0 : i32
    return %c0_i32, %c0_i32_0 : i32, i32
  }
  func.func @transform_5(%arg0: i32) -> (i32, i32) {
    %c0_i32 = arith.constant 0 : i32
    %c0_i32_0 = arith.constant 0 : i32
    return %arg0, %c0_i32 : i32, i32
  }
}

</mosaic_0001>

<llo_original>
// kernel: tpu_custom_call.1
$region0: #{tpu_custom_call.1}
  #allocation0 [shape = 'u32[]', space=smem, size = 0x4, offset = 0x4, fixed_abs, tag = 'smem constant byte address 0x4 - core index']
  #allocation1 [shape = 'u32[144,128]{1,0:T(1,128)}', space=vmem, size = 0x12000, scoped, tag = 'internal scratch']
  %s0 = inlined_call_operand.hbm [shape: f32[8,32], index: 0, kind: input, shape index: {}]
  %s1 = inlined_call_operand.hbm [shape: bf16[32,128], index: 1, kind: input, shape index: {}]
  %s2 = inlined_call_operand.vmem [shape: f32[1,128], index: 2, kind: input, shape index: {}]
  %s3 = inlined_call_operand.hbm [shape: bf16[128,128], index: 3, kind: input, shape index: {}]
  %s4 = inlined_call_operand.vmem [shape: f32[1,128], index: 4, kind: input, shape index: {}]
  %s5 = inlined_call_operand.hbm [shape: f32[8,128], index: 5, kind: output, shape index: {}]
  %s6 = sld [smem:[#allocation0]]
  $region42: #{tpu_custom_call.1} parent=0
    _
  %s8 = ssub.s32 1, %s6
  %s9 = scalar_select 0, %s8, %s6
  $region1: #{tpu_custom_call.1} parent=0
    #allocation2 [shape = 'u8[4096]{0}', space=vmem, size = 0x1000, scoped, tag = 'input window, operand 0, single buffered']
    #allocation3 [shape = 's32[1]{0}', space=sflag, size = 0x4, scoped, tag = 'scoped memory for tpu_custom_call.1']
    #allocation4 [shape = 's32[1]{0}', space=sflag, size = 0x4, scoped, tag = 'scoped memory for tpu_custom_call.1']
    #allocation5 [shape = 'u8[8192]{0}', space=vmem, size = 0x2000, scoped, tag = 'input window, operand 1, single buffered']
    #allocation6 [shape = 's32[1]{0}', space=sflag, size = 0x4, scoped, tag = 'scoped memory for tpu_custom_call.1']
    #allocation7 [shape = 'u8[32768]{0}', space=vmem, size = 0x8000, scoped, tag = 'input window, operand 3, single buffered']
    #allocation8 [shape = 'u8[4096]{0}', space=vmem, size = 0x1000, scoped, tag = 'output window, operand 0, single buffered']
    %10 = vsyncpa [#allocation3], 0
    %11 = vsyncpa [#allocation6], 0
    %12 = vsyncpa [#allocation4], 0
    // Predicated region
    $region2: #{tpu_custom_call.1} parent=1 // pred_check
      _
    $region3: #{tpu_custom_call.1} parent=1 // pred_check_branch
      %14 = sbr.rel (0) target = $region5
    $region4: #{tpu_custom_call.1} parent=1 // pred_region
      %s16 = ssub.s32 128, 128
      %17 = vsyncadd [#allocation3], %s16
      %s19 = sshll.u32 [#allocation2], 4
      %s20 = int_to_ptr.vmem [resolvable:$true] %s19
      %22 = dma.hbm_to_vmem [thread:$0]  %s0, 128, %s20, [#allocation3]
    $region5: #{tpu_custom_call.1} parent=1 // pred_fallthru
      _
    // Predicated region
    $region6: #{tpu_custom_call.1} parent=1 // pred_check
      _
    $region7: #{tpu_custom_call.1} parent=1 // pred_check_branch
      %24 = sbr.rel (0) target = $region9
    $region8: #{tpu_custom_call.1} parent=1 // pred_region
      %s26 = ssub.s32 256, 256
      %27 = vsyncadd [#allocation6], %s26
      %s28 = sshll.u32 [#allocation5], 4
      %s29 = int_to_ptr.vmem [resolvable:$true] %s28
      %34 = dma.hbm_to_vmem [thread:$0]  %s1, 256, %s29, [#allocation6], 64, 64, 4
    $region9: #{tpu_custom_call.1} parent=1 // pred_fallthru
      _
    // Predicated region
    $region10: #{tpu_custom_call.1} parent=1 // pred_check
      _
    $region11: #{tpu_custom_call.1} parent=1 // pred_check_branch
      %36 = sbr.rel (0) target = $region13
    $region12: #{tpu_custom_call.1} parent=1 // pred_region
      _
    $region13: #{tpu_custom_call.1} parent=1 // pred_fallthru
      _
    // Predicated region
    $region14: #{tpu_custom_call.1} parent=1 // pred_check
      _
    $region15: #{tpu_custom_call.1} parent=1 // pred_check_branch
      %38 = sbr.rel (0) target = $region17
    $region16: #{tpu_custom_call.1} parent=1 // pred_region
      %s40 = ssub.s32 1024, 1024
      %41 = vsyncadd [#allocation6], %s40
      %s42 = sshll.u32 [#allocation7], 4
      %s43 = int_to_ptr.vmem [resolvable:$true] %s42
      %48 = dma.hbm_to_vmem [thread:$0]  %s3, 1024, %s43, [#allocation6], 64, 64, 4
    $region17: #{tpu_custom_call.1} parent=1 // pred_fallthru
      _
    // Predicated region
    $region18: #{tpu_custom_call.1} parent=1 // pred_check
      _
    $region19: #{tpu_custom_call.1} parent=1 // pred_check_branch
      %50 = sbr.rel (0) target = $region21
    $region20: #{tpu_custom_call.1} parent=1 // pred_region
      _
    $region21: #{tpu_custom_call.1} parent=1 // pred_fallthru
      _
    // Predicated region
    $region22: #{tpu_custom_call.1} parent=1 // pred_check
      _
    $region23: #{tpu_custom_call.1} parent=1 // pred_check_branch
      %52 = sbr.rel (0) target = $region25
    $region24: #{tpu_custom_call.1} parent=1 // pred_region
      %53 = dma.done [#allocation3], 128
    $region25: #{tpu_custom_call.1} parent=1 // pred_fallthru
      _
    // Predicated region
    $region26: #{tpu_custom_call.1} parent=1 // pred_check
      _
    $region27: #{tpu_custom_call.1} parent=1 // pred_check_branch
      %55 = sbr.rel (0) target = $region29
    $region28: #{tpu_custom_call.1} parent=1 // pred_region
      %56 = dma.done [#allocation6], 256
    $region29: #{tpu_custom_call.1} parent=1 // pred_fallthru
      _
    // Predicated region
    $region30: #{tpu_custom_call.1} parent=1 // pred_check
      _
    $region31: #{tpu_custom_call.1} parent=1 // pred_check_branch
      %58 = sbr.rel (0) target = $region33
    $region32: #{tpu_custom_call.1} parent=1 // pred_region
      %59 = dma.done [#allocation6], 1024
    $region33: #{tpu_custom_call.1} parent=1 // pred_fallthru
      _
    %v61 = vld [vmem:[#allocation2] sm:$0xff]
    %v62 = vpack.c.bf16 %v61, %v61
    %v63 = vld [vmem:[#allocation5] sm:$0xf]
    %v64 = vld [vmem:[#allocation5 + $0x4] sm:$0xf]
    %v65 = vld [vmem:[#allocation5 + $0x8] sm:$0xf]
    %v66 = vld [vmem:[#allocation5 + $0xc] sm:$0xf]
    %v67 = vld [vmem:[%s2] sm:$0x1]
    %v69 = vlaneseq
    %v70 = vshrl.u32 %v69, 7
    %v71 = vsub.s32 0, %v70
    %v72 = vrot.slane %v67, %v71
    %v78 = vunpack.c.l.b16 %v63
    %v79 = vunpack.c.l.b16 %v64
    %v80 = vunpack.c.l.b16 %v65
    %v81 = vunpack.c.l.b16 %v66
    %v82 = vpack.c.b16 %v79, %v78
    %v83 = vpack.c.b16 %v81, %v80
    %vm86 = vcmask 261120
    %v88 = vsel %vm86, %v62, 0
    %90 = vmatprep.subr.bf16.mxu0 0
    %91 = vmatpush1.bf16.msra.mxu0 0
    %92 = vmatprep.subr.bf16.mxu0 0
    %93 = vmatpush1.bf16.msra.mxu0 0
    %94 = vmatprep.subr.bf16.mxu0 0
    %95 = vmatpush1.bf16.msra.mxu0 0
    %96 = vmatprep.subr.bf16.mxu0 0
    %97 = vmatpush1.bf16.msra.mxu0 0
    %98 = vmatprep.subr.bf16.mxu0 0
    %99 = vmatpush1.bf16.msra.mxu0 0
    %100 = vmatprep.subr.bf16.mxu0 0
    %101 = vmatpush1.bf16.msra.mxu0 0
    %102 = vmatprep.subr.bf16.mxu0 0
    %103 = vmatpush1.bf16.msra.mxu0 %v83
    %104 = vmatprep.subr.bf16.mxu0 0
    %105 = vmatpush1.bf16.msra.mxu0 %v82
    %106 = vmatprep.subr.bf16.mxu0 0
    %107 = vmatpush2.bf16.msra.mxu0 0
    %108 = vmatprep.subr.bf16.mxu0 0
    %109 = vmatpush2.bf16.msra.mxu0 0
    %110 = vmatprep.subr.bf16.mxu0 0
    %111 = vmatpush2.bf16.msra.mxu0 0
    %112 = vmatprep.subr.bf16.mxu0 0
    %113 = vmatpush2.bf16.msra.mxu0 0
    %114 = vmatprep.subr.bf16.mxu0 0
    %115 = vmatpush2.bf16.msra.mxu0 0
    %116 = vmatprep.subr.bf16.mxu0 0
    %117 = vmatpush2.bf16.msra.mxu0 0
    %118 = vmatprep.subr.bf16.mxu0 0
    %119 = vmatpush2.bf16.msra.mxu0 0
    %120 = vmatprep.subr.bf16.mxu0 0
    %121 = vmatpush2.bf16.msra.mxu0 0
    %122 = vmatprep.mubr.bf16.mxu0 0
    %123 = vmatmul.mubr.bf16.gmra.mxu0 %v88
    %v124 = vpop.f32.mrf.mxu0
    %v125 = vadd.f32 %v72, %v124
    %v126 = vpop.f32.mrf.mxu0
    %v127 = vpop.f32.mrf.mxu0
    %v128 = vpop.f32.mrf.mxu0
    %129 = vdwg.mxu0
    %v130 = vmax.f32 %v125, 0.0
    %v131 = vpack.c.bf16 %v130, %v130
    %v132 = vld [vmem:[#allocation7] sm:$0xf]
    %v133 = vld [vmem:[#allocation7 + $0x4] sm:$0xf]
    %v134 = vld [vmem:[#allocation7 + $0x8] sm:$0xf]
    %v135 = vld [vmem:[#allocation7 + $0xc] sm:$0xf]
    %v136 = vld [vmem:[#allocation7 + $0x10] sm:$0xf]
    %v137 = vld [vmem:[#allocation7 + $0x14] sm:$0xf]
    %v138 = vld [vmem:[#allocation7 + $0x18] sm:$0xf]
    %v139 = vld [vmem:[#allocation7 + $0x1c] sm:$0xf]
    %v140 = vld [vmem:[#allocation7 + $0x20] sm:$0xf]
    %v141 = vld [vmem:[#allocation7 + $0x24] sm:$0xf]
    %v142 = vld [vmem:[#allocation7 + $0x28] sm:$0xf]
    %v143 = vld [vmem:[#allocation7 + $0x2c] sm:$0xf]
    %v144 = vld [vmem:[#allocation7 + $0x30] sm:$0xf]
    %v145 = vld [vmem:[#allocation7 + $0x34] sm:$0xf]
    %v146 = vld [vmem:[#allocation7 + $0x38] sm:$0xf]
    %v147 = vld [vmem:[#allocation7 + $0x3c] sm:$0xf]
    %v148 = vld [vmem:[%s4] sm:$0x1]
    %v150 = vlaneseq
    %v151 = vshrl.u32 %v150, 7
    %v152 = vsub.s32 0, %v151
    %v153 = vrot.slane %v148, %v152
    %v171 = vunpack.c.l.b16 %v132
    %v172 = vunpack.c.l.b16 %v133
    %v173 = vunpack.c.l.b16 %v134
    %v174 = vunpack.c.l.b16 %v135
    %v175 = vunpack.c.l.b16 %v136
    %v176 = vunpack.c.l.b16 %v137
    %v177 = vunpack.c.l.b16 %v138
    %v178 = vunpack.c.l.b16 %v139
    %v179 = vunpack.c.l.b16 %v140
    %v180 = vunpack.c.l.b16 %v141
    %v181 = vunpack.c.l.b16 %v142
    %v182 = vunpack.c.l.b16 %v143
    %v183 = vunpack.c.l.b16 %v144
    %v184 = vunpack.c.l.b16 %v145
    %v185 = vunpack.c.l.b16 %v146
    %v186 = vunpack.c.l.b16 %v147
    %v187 = vpack.c.b16 %v172, %v171
    %v188 = vpack.c.b16 %v174, %v173
    %v189 = vpack.c.b16 %v176, %v175
    %v190 = vpack.c.b16 %v178, %v177
    %v191 = vpack.c.b16 %v180, %v179
    %v192 = vpack.c.b16 %v182, %v181
    %v193 = vpack.c.b16 %v184, %v183
    %v194 = vpack.c.b16 %v186, %v185
    %203 = vmatprep.subr.bf16.mxu0 0
    %204 = vmatpush1.bf16.msra.mxu0 %v194
    %205 = vmatprep.subr.bf16.mxu0 0
    %206 = vmatpush1.bf16.msra.mxu0 %v193
    %207 = vmatprep.subr.bf16.mxu0 0
    %208 = vmatpush1.bf16.msra.mxu0 %v192
    %209 = vmatprep.subr.bf16.mxu0 0
    %210 = vmatpush1.bf16.msra.mxu0 %v191
    %211 = vmatprep.subr.bf16.mxu0 0
    %212 = vmatpush1.bf16.msra.mxu0 %v190
    %213 = vmatprep.subr.bf16.mxu0 0
    %214 = vmatpush1.bf16.msra.mxu0 %v189
    %215 = vmatprep.subr.bf16.mxu0 0
    %216 = vmatpush1.bf16.msra.mxu0 %v188
    %217 = vmatprep.subr.bf16.mxu0 0
    %218 = vmatpush1.bf16.msra.mxu0 %v187
    %219 = vmatprep.subr.bf16.mxu0 0
    %220 = vmatpush2.bf16.msra.mxu0 0
    %221 = vmatprep.subr.bf16.mxu0 0
    %222 = vmatpush2.bf16.msra.mxu0 0
    %223 = vmatprep.subr.bf16.mxu0 0
    %224 = vmatpush2.bf16.msra.mxu0 0
    %225 = vmatprep.subr.bf16.mxu0 0
    %226 = vmatpush2.bf16.msra.mxu0 0
    %227 = vmatprep.subr.bf16.mxu0 0
    %228 = vmatpush2.bf16.msra.mxu0 0
    %229 = vmatprep.subr.bf16.mxu0 0
    %230 = vmatpush2.bf16.msra.mxu0 0
    %231 = vmatprep.subr.bf16.mxu0 0
    %232 = vmatpush2.bf16.msra.mxu0 0
    %233 = vmatprep.subr.bf16.mxu0 0
    %234 = vmatpush2.bf16.msra.mxu0 0
    %235 = vmatprep.mubr.bf16.mxu0 0
    %236 = vmatmul.mubr.bf16.gmra.mxu0 %v131
    %v237 = vpop.f32.mrf.mxu0
    %v238 = vadd.f32 %v153, %v237
    %v239 = vpop.f32.mrf.mxu0
    %v240 = vpop.f32.mrf.mxu0
    %v241 = vpop.f32.mrf.mxu0
    %242 = vdwg.mxu0
    %v243 = vmax.f32 %v238, 0.0
    %244 = vst [vmem:[#allocation8] sm:$0xff] %v243
    // Predicated region
    $region34: #{tpu_custom_call.1} parent=1 // pred_check
      _
    $region35: #{tpu_custom_call.1} parent=1 // pred_check_branch
      %246 = sbr.rel (0) target = $region37
    $region36: #{tpu_custom_call.1} parent=1 // pred_region
      %s248 = ssub.s32 128, 128
      %249 = vsyncadd [#allocation4], %s248
      %s251 = sshll.u32 [#allocation8], 4
      %s252 = int_to_ptr.vmem [resolvable:$true] %s251
      %254 = dma.vmem_to_hbm [thread:$0]  %s252, 128, %s5, [#allocation4]
    $region37: #{tpu_custom_call.1} parent=1 // pred_fallthru
      _
    // Predicated region
    $region38: #{tpu_custom_call.1} parent=1 // pred_check
      _
    $region39: #{tpu_custom_call.1} parent=1 // pred_check_branch
      %256 = sbr.rel (0) target = $region41
    $region40: #{tpu_custom_call.1} parent=1 // pred_region
      %257 = dma.done [#allocation4], 128
    $region41: #{tpu_custom_call.1} parent=1 // pred_fallthru
      _
    %258 = vsyncpa [#allocation3], 1
    %259 = vsyncpa [#allocation6], 1
    %260 = vsyncpa [#allocation4], 1

</llo_original>
